<compile_context>
chip_gen: v6e
topology: v6e:2x2x1
jax: 0.10.0
libtpu: 0.0.40
codegen_flags: <defaults>
</compile_context>

<pallas_src>
import math

import jax
import jax.numpy as jnp
from jax.experimental import pallas as pl
from jax.experimental.pallas import tpu as pltpu


def _round_up(x, m):
    return ((x + m - 1) // m) * m


def _largest_divisor_tile(total, unit, cap):
    """Largest multiple of `unit` that divides `total` and is <= cap (falls back to unit)."""
    best = unit
    t = unit
    limit = min(cap, total)
    while t <= limit:
        if total % t == 0:
            best = t
        t += unit
    return best


def _fused_proj_kernel(x_ref, w_ref, b_ref, out_ref):
    # out = x @ W_fused + b_fused ; bf16 operands, f32 MXU accumulation, bias in f32.
    acc = jnp.dot(x_ref[...], w_ref[...], preferred_element_type=jnp.float32)
    out_ref[...] = (acc + b_ref[...]).astype(out_ref.dtype)


def fuse_params(params, prompt_length, output_dim, weight_dtype=jnp.bfloat16):
    """One-time parameter folding AND padding.  Call once at init, NOT per forward.

    Exactness assumption: the module attends the latent queries to a SINGLE
    key/value token (the PyTorch forward does paragraphs.unsqueeze(1), i.e. kv
    sequence length == 1), so the softmax is identically 1 and the mean over
    latents is a no-op.  If the kv sequence length ever becomes > 1 this fold is
    silently invalid — do not reuse it for a multi-token variant.
    """
    D = params["wv"].shape[0]
    PO = prompt_length * output_dim
    PO_pad = _round_up(PO, 128)

    # Fold:  W_fused (D, PO) ;  b_fused (PO,)
    w_fused = params["wv"].T @ params["wo"].T @ params["wp"].T
    b_fused = (params["bv"] @ params["wo"].T + params["bo"]) @ params["wp"].T + params["bp"]

    # Pad once, at fuse time, to a lane-aligned width so the forward path never
    # re-reads/re-writes the full weight just to pad it.
    if PO_pad != PO:
        w_fused = jnp.pad(w_fused, ((0, 0), (0, PO_pad - PO)))
        b_fused = jnp.pad(b_fused, (0, PO_pad - PO))

    # TODO(synk): optional fp8 (v7x) / int8 (v5e,v6e) weight quantization with
    # per-column scales would halve the dominant W HBM stream again (accuracy tradeoff).
    return {
        "w_fused": w_fused.astype(weight_dtype),                    # (D, PO_pad) bf16
        "b_fused": b_fused.reshape(1, PO_pad).astype(jnp.float32),  # (1, PO_pad) f32
        "eos_token": params["eos_token"].astype(jnp.float32),
        "D": D,
        "PO": PO,
        "PO_pad": PO_pad,
    }


def perceiver_resampler_forward(paragraphs, fused, prompt_length, output_dim,
                                use_eos=True, out_dtype=jnp.bfloat16,
                                force_pallas=False):
    assert paragraphs.ndim == 2, "expected (batch, input_dim) paragraphs"
    B, D = paragraphs.shape
    PO = prompt_length * output_dim
    PO_pad = fused["PO_pad"]
    assert fused["D"] == D and fused["PO"] == PO

    w = fused["w_fused"]            # (D, PO_pad), padded once at init
    b = fused["b_fused"]            # (1, PO_pad)

    # ---- per-generation VMEM budget / tile caps ---------------------------------
    try:
        info = pltpu.get_tpu_info()
        vmem_phys = int(getattr(info, "vmem_capacity_bytes", 64 * 1024 * 1024))
    except Exception:
        vmem_phys = 64 * 1024 * 1024
    vmem_budget = (vmem_phys * 7) // 8          # headroom for Mosaic internal scratch
    big_vmem = vmem_phys > 64 * 1024 * 1024     # v5e / v6e (128 MiB) vs v7x (64 MiB)
    tb_cap = 512 if big_vmem else 256
    tn_cap = 1024 if big_vmem else 512

    # ---- dead-padding-free tile selection ----------------------------------------
    B_pad = _round_up(B, 8)
    tb = _largest_divisor_tile(B_pad, 8, tb_cap)
    tn = _largest_divisor_tile(PO_pad, 128, tn_cap)

    out_bytes = jnp.dtype(out_dtype).itemsize

    def _vmem_estimate(tb_, tn_):
        return (2 * tb_ * D * 2        # x tile, double-buffered, bf16
                + 2 * D * tn_ * 2      # W tile, double-buffered, bf16
                + 2 * tn_ * 4          # bias tile, f32
                + 2 * tb_ * tn_ * out_bytes)

    while _vmem_estimate(tb, tn) > vmem_budget:
        if tn > 128:
            tn = _largest_divisor_tile(PO_pad, 128, tn // 2)
        elif tb > 8:
            tb = _largest_divisor_tile(B_pad, 8, tb // 2)
        else:
            break
    # TODO(synk): for very large D, add a third "arbitrary" K grid axis with an f32
    # VMEM accumulator (init at k==0 / store at k==last via pl.when) instead of
    # shrinking tb/tn to fit v7x's 64 MiB.

    n_o_tiles = PO_pad // tn
    n_b_tiles = B_pad // tb

    # ---- optional XLA fast path for sub-tile problems ----------------------------
    if (not force_pallas) and n_o_tiles == 1 and n_b_tiles == 1:
        flat = jnp.dot(paragraphs.astype(jnp.bfloat16), w,
                       preferred_element_type=jnp.float32) + b
        flat = flat.astype(out_dtype)
    else:
        # ---- layout glue on the (small) activation only ---------------------------
        x = paragraphs.astype(jnp.bfloat16)
        if B_pad != B:
            x = jnp.pad(x, ((0, B_pad - B), (0, 0)))

        vmem_limit = int(min(vmem_budget,
                             max(32 * 1024 * 1024, 2 * _vmem_estimate(tb, tn))))

        # Grid: output tiles OUTER (megacore-sharded => disjoint W per core),
        # batch tiles INNER (W block index constant across the sweep => W streamed
        # from HBM exactly once).
        flat = pl.pallas_call(
            _fused_proj_kernel,
            out_shape=jax.ShapeDtypeStruct((B_pad, PO_pad), out_dtype),
            grid=(n_o_tiles, n_b_tiles),
            in_specs=[
                pl.BlockSpec((tb, D), lambda j, i: (i, 0)),   # x tile (varies inner)
                pl.BlockSpec((D, tn), lambda j, i: (0, j)),   # W tile (constant inner)
                pl.BlockSpec((1, tn), lambda j, i: (0, j)),   # bias tile
            ],
            out_specs=pl.BlockSpec((tb, tn), lambda j, i: (i, j)),
            compiler_params=pltpu.CompilerParams(
                dimension_semantics=("parallel", "arbitrary"),
                vmem_limit_bytes=vmem_limit,
            ),
            cost_estimate=pl.CostEstimate(
                flops=2 * B_pad * D * PO_pad,
                transcendentals=0,
                bytes_accessed=(B_pad * D * 2 * n_o_tiles      # x, re-read per output sweep
                                + D * PO_pad * 2               # W, streamed once
                                + PO_pad * 4
                                + B_pad * PO_pad * out_bytes),
            ),
        )(x, w, b)

    out = flat[:B, :PO]
    prompts = out.reshape(B, prompt_length, output_dim)
    if use_eos:
        eos = jnp.broadcast_to(fused["eos_token"].astype(out_dtype)[None, None, :],
                               (B, 1, output_dim))
        prompts = jnp.concatenate([prompts, eos], axis=1)
    return prompts


def init_params(key, input_dim, output_dim, prompt_length, num_latents):
    ks = jax.random.split(key, 12)
    f32 = jnp.float32
    return {
        "latent_queries": jax.random.normal(ks[0], (num_latents, input_dim), f32),
        # MultiheadAttention in_proj (split into q/k/v pieces) + out_proj
        "wq": jax.random.normal(ks[1], (input_dim, input_dim), f32) * 0.1,
        "wk": jax.random.normal(ks[2], (input_dim, input_dim), f32) * 0.1,
        "wv": jax.random.normal(ks[3], (input_dim, input_dim), f32) * 0.1,
        "bq": jax.random.normal(ks[4], (input_dim,), f32) * 0.1,
        "bk": jax.random.normal(ks[5], (input_dim,), f32) * 0.1,
        "bv": jax.random.normal(ks[6], (input_dim,), f32) * 0.1,
        "wo": jax.random.normal(ks[7], (input_dim, input_dim), f32) * 0.1,
        "bo": jax.random.normal(ks[8], (input_dim,), f32) * 0.1,
        # output_projection: Linear(input_dim, prompt_length * output_dim)
        "wp": jax.random.normal(ks[9], (prompt_length * output_dim, input_dim), f32) * 0.1,
        "bp": jax.random.normal(ks[10], (prompt_length * output_dim,), f32) * 0.1,
        "eos_token": jax.random.normal(ks[11], (output_dim,), f32),
    }


def ref_forward(paragraphs, params, prompt_length, output_dim, use_eos=True):
    """Pure-JAX mirror of the PyTorch forward (full attention path, f32)."""
    B, D = paragraphs.shape
    L = params["latent_queries"].shape[0]
    lat = jnp.broadcast_to(params["latent_queries"][None], (B, L, D))
    q = lat @ params["wq"].T + params["bq"]
    k = (paragraphs @ params["wk"].T + params["bk"])[:, None, :]
    v = (paragraphs @ params["wv"].T + params["bv"])[:, None, :]
    scores = jnp.einsum("bld,bsd->bls", q, k) / math.sqrt(D)
    w = jax.nn.softmax(scores, axis=-1)
    att = jnp.einsum("bls,bsd->bld", w, v)
    att = att @ params["wo"].T + params["bo"]
    out = att.mean(axis=1) @ params["wp"].T + params["bp"]
    prompts = out.reshape(B, prompt_length, output_dim)
    if use_eos:
        eos = jnp.broadcast_to(params["eos_token"][None, None, :], (B, 1, output_dim))
        prompts = jnp.concatenate([prompts, eos], axis=1)
    return prompts


if __name__ == "__main__":
    B = 2            # batch
    D = 32           # input_dim
    O = 16           # output_dim
    P = 8            # prompt_length
    L = 16           # num_latents

    key = jax.random.PRNGKey(0)
    kx, kp = jax.random.split(key)
    params = init_params(kp, D, O, P, L)
    paragraphs = jax.random.normal(kx, (B, D), jnp.float32)

    fused = fuse_params(params, P, O)            # one-time fold + pad (not per call)
    # force_pallas=True so the Pallas kernel itself is exercised even at demo sizes
    # (at these sub-tile sizes the plain-XLA fast path would normally be chosen).
    out = perceiver_resampler_forward(paragraphs, fused, P, O, use_eos=True,
                                      out_dtype=jnp.bfloat16, force_pallas=True)
    out = jax.block_until_ready(out)

    ref = ref_forward(paragraphs, params, P, O, use_eos=True)
    assert out.shape == (B, P + 1, O), out.shape
    # bf16 operands/output with f32 accumulation: looser tolerance than pure-f32.
    err = float(jnp.max(jnp.abs(out.astype(jnp.float32) - ref)))
    assert jnp.allclose(out.astype(jnp.float32), ref, atol=3e-2, rtol=3e-2), err
    print("KERNEL_OK")
</pallas_src>

<mosaic_0001>
module attributes {stable_mosaic.version = 11 : i64} {
  func.func @_fused_proj_kernel(%arg0: i32, %arg1: i32, %arg2: memref<8x32xbf16, #tpu.memory_space<vmem>>, %arg3: memref<32x128xbf16, #tpu.memory_space<vmem>>, %arg4: memref<1x128xf32, #tpu.memory_space<vmem>>, %arg5: memref<8x128xbf16, #tpu.memory_space<vmem>>) attributes {dimension_semantics = [#tpu.dimension_semantics<parallel>, #tpu.dimension_semantics<arbitrary>], iteration_bounds = array<i64: 1, 1>, scalar_prefetch = 0 : i64, scratch_operands = 0 : i64, tpu.core_type = #tpu.core_type<tc>, window_params = [{transform_indices = @transform_0, window_bounds = array<i64: 8, 32>}, {transform_indices = @transform_1, window_bounds = array<i64: 32, 128>}, {transform_indices = @transform_2, window_bounds = array<i64: 1, 128>}, {transform_indices = @transform_3, window_bounds = array<i64: 8, 128>}]} {
    %c0 = arith.constant 0 : index
    %c0_0 = arith.constant 0 : index
    %0 = vector.load %arg2[%c0, %c0_0] : memref<8x32xbf16, #tpu.memory_space<vmem>>, vector<8x32xbf16>
    %c0_1 = arith.constant 0 : index
    %c0_2 = arith.constant 0 : index
    %1 = vector.load %arg3[%c0_1, %c0_2] : memref<32x128xbf16, #tpu.memory_space<vmem>>, vector<32x128xbf16>
    %cst = arith.constant dense<0.000000e+00> : vector<8x128xf32>
    %2 = tpu.matmul %0, %1, %cst {dimension_numbers = #tpu.dot_dimension_numbers<[1], [0], [0], [1], [0, 0, 1, 1], [], []>} : vector<8x32xbf16>, vector<32x128xbf16>, vector<8x128xf32> -> vector<8x128xf32>
    %c0_3 = arith.constant 0 : index
    %c0_4 = arith.constant 0 : index
    %3 = vector.load %arg4[%c0_3, %c0_4] : memref<1x128xf32, #tpu.memory_space<vmem>>, vector<1x128xf32>
    %4 = vector.broadcast %3 : vector<1x128xf32> to vector<8x128xf32>
    %5 = arith.addf %2, %4 : vector<8x128xf32>
    %6 = arith.truncf %5 : vector<8x128xf32> to vector<8x128xbf16>
    %c0_5 = arith.constant 0 : index
    %c0_6 = arith.constant 0 : index
    %7 = vector.load %arg5[%c0_5, %c0_6] : memref<8x128xbf16, #tpu.memory_space<vmem>>, vector<8x128xbf16>
    tpu.vector_store %arg5[%c0_5, %c0_6], %6 {strides = array<i32>} : memref<8x128xbf16, #tpu.memory_space<vmem>>, vector<8x128xbf16>,
    return
  }
  func.func @transform_0(%arg0: i32, %arg1: i32) -> (i32, i32) {
    %c0_i32 = arith.constant 0 : i32
    %c0_i32_0 = arith.constant 0 : i32
    return %arg1, %c0_i32 : i32, i32
  }
  func.func @transform_1(%arg0: i32, %arg1: i32) -> (i32, i32) {
    %c0_i32 = arith.constant 0 : i32
    %c0_i32_0 = arith.constant 0 : i32
    return %c0_i32, %arg0 : i32, i32
  }
  func.func @transform_2(%arg0: i32, %arg1: i32) -> (i32, i32) {
    %c0_i32 = arith.constant 0 : i32
    %c0_i32_0 = arith.constant 0 : i32
    return %c0_i32, %arg0 : i32, i32
  }
  func.func @transform_3(%arg0: i32, %arg1: i32) -> (i32, i32) {
    %c0_i32 = arith.constant 0 : i32
    return %arg1, %arg0 : i32, i32
  }
}

</mosaic_0001>

<llo_original>
// kernel: tpu_custom_call.1
$region0: #{tpu_custom_call.1}
  #allocation0 [shape = 'u32[]', space=smem, size = 0x4, offset = 0x4, fixed_abs, tag = 'smem constant byte address 0x4 - core index']
  #allocation1 [shape = 'u32[144,128]{1,0:T(1,128)}', space=vmem, size = 0x12000, scoped, tag = 'internal scratch']
  %s0 = inlined_call_operand.hbm [shape: bf16[8,32], index: 0, kind: input, shape index: {}]
  %s1 = inlined_call_operand.hbm [shape: bf16[32,128], index: 1, kind: input, shape index: {}]
  %s2 = inlined_call_operand.vmem [shape: f32[1,128], index: 2, kind: input, shape index: {}]
  %s3 = inlined_call_operand.hbm [shape: bf16[8,128], index: 3, kind: output, shape index: {}]
  %s4 = sld [smem:[#allocation0]]
  $region30: #{tpu_custom_call.1} parent=0
    _
  %s6 = ssub.s32 1, %s4
  %s7 = scalar_select 0, %s6, %s4
  $region1: #{tpu_custom_call.1} parent=0
    #allocation2 [shape = 'u8[2048]{0}', space=vmem, size = 0x800, scoped, tag = 'input window, operand 0, single buffered']
    #allocation3 [shape = 's32[1]{0}', space=sflag, size = 0x4, scoped, tag = 'scoped memory for tpu_custom_call.1']
    #allocation4 [shape = 's32[1]{0}', space=sflag, size = 0x4, scoped, tag = 'scoped memory for tpu_custom_call.1']
    #allocation5 [shape = 'u8[8192]{0}', space=vmem, size = 0x2000, scoped, tag = 'input window, operand 1, single buffered']
    #allocation6 [shape = 's32[1]{0}', space=sflag, size = 0x4, scoped, tag = 'scoped memory for tpu_custom_call.1']
    #allocation7 [shape = 'u8[2048]{0}', space=vmem, size = 0x800, scoped, tag = 'output window, operand 0, single buffered']
    %8 = vsyncpa [#allocation3], 0
    %9 = vsyncpa [#allocation6], 0
    %10 = vsyncpa [#allocation4], 0
    // Predicated region
    $region2: #{tpu_custom_call.1} parent=1 // pred_check
      _
    $region3: #{tpu_custom_call.1} parent=1 // pred_check_branch
      %12 = sbr.rel (0) target = $region5
    $region4: #{tpu_custom_call.1} parent=1 // pred_region
      %s14 = ssub.s32 64, 64
      %15 = vsyncadd [#allocation3], %s14
      %s17 = sshll.u32 [#allocation2], 4
      %s18 = int_to_ptr.vmem [resolvable:$true] %s17
      %20 = dma.hbm_to_vmem [thread:$0]  %s0, 64, %s18, [#allocation3]
    $region5: #{tpu_custom_call.1} parent=1 // pred_fallthru
      _
    // Predicated region
    $region6: #{tpu_custom_call.1} parent=1 // pred_check
      _
    $region7: #{tpu_custom_call.1} parent=1 // pred_check_branch
      %22 = sbr.rel (0) target = $region9
    $region8: #{tpu_custom_call.1} parent=1 // pred_region
      %s24 = ssub.s32 256, 256
      %25 = vsyncadd [#allocation6], %s24
      %s26 = sshll.u32 [#allocation5], 4
      %s27 = int_to_ptr.vmem [resolvable:$true] %s26
      %32 = dma.hbm_to_vmem [thread:$0]  %s1, 256, %s27, [#allocation6], 64, 64, 4
    $region9: #{tpu_custom_call.1} parent=1 // pred_fallthru
      _
    // Predicated region
    $region10: #{tpu_custom_call.1} parent=1 // pred_check
      _
    $region11: #{tpu_custom_call.1} parent=1 // pred_check_branch
      %34 = sbr.rel (0) target = $region13
    $region12: #{tpu_custom_call.1} parent=1 // pred_region
      _
    $region13: #{tpu_custom_call.1} parent=1 // pred_fallthru
      _
    // Predicated region
    $region14: #{tpu_custom_call.1} parent=1 // pred_check
      _
    $region15: #{tpu_custom_call.1} parent=1 // pred_check_branch
      %36 = sbr.rel (0) target = $region17
    $region16: #{tpu_custom_call.1} parent=1 // pred_region
      %37 = dma.done [#allocation3], 64
    $region17: #{tpu_custom_call.1} parent=1 // pred_fallthru
      _
    // Predicated region
    $region18: #{tpu_custom_call.1} parent=1 // pred_check
      _
    $region19: #{tpu_custom_call.1} parent=1 // pred_check_branch
      %39 = sbr.rel (0) target = $region21
    $region20: #{tpu_custom_call.1} parent=1 // pred_region
      %40 = dma.done [#allocation6], 256
    $region21: #{tpu_custom_call.1} parent=1 // pred_fallthru
      _
    %v42 = vld [vmem:[#allocation2] sm:$0xf]
    %v43 = vld [vmem:[#allocation5] sm:$0xf]
    %v44 = vld [vmem:[#allocation5 + $0x4] sm:$0xf]
    %v45 = vld [vmem:[#allocation5 + $0x8] sm:$0xf]
    %v46 = vld [vmem:[#allocation5 + $0xc] sm:$0xf]
    %v47 = vld [vmem:[%s2] sm:$0x1]
    %v49 = vlaneseq
    %v50 = vshrl.u32 %v49, 7
    %v51 = vsub.s32 0, %v50
    %v52 = vrot.slane %v47, %v51
    %v58 = vunpack.c.l.b16 %v43
    %v59 = vunpack.c.l.b16 %v44
    %v60 = vunpack.c.l.b16 %v45
    %v61 = vunpack.c.l.b16 %v46
    %v62 = vpack.c.b16 %v59, %v58
    %v63 = vpack.c.b16 %v61, %v60
    %vm66 = vcmask 261120
    %v68 = vsel %vm66, %v42, 0
    %70 = vmatprep.subr.bf16.mxu0 0
    %71 = vmatpush1.bf16.msra.mxu0 0
    %72 = vmatprep.subr.bf16.mxu0 0
    %73 = vmatpush1.bf16.msra.mxu0 0
    %74 = vmatprep.subr.bf16.mxu0 0
    %75 = vmatpush1.bf16.msra.mxu0 0
    %76 = vmatprep.subr.bf16.mxu0 0
    %77 = vmatpush1.bf16.msra.mxu0 0
    %78 = vmatprep.subr.bf16.mxu0 0
    %79 = vmatpush1.bf16.msra.mxu0 0
    %80 = vmatprep.subr.bf16.mxu0 0
    %81 = vmatpush1.bf16.msra.mxu0 0
    %82 = vmatprep.subr.bf16.mxu0 0
    %83 = vmatpush1.bf16.msra.mxu0 %v63
    %84 = vmatprep.subr.bf16.mxu0 0
    %85 = vmatpush1.bf16.msra.mxu0 %v62
    %86 = vmatprep.subr.bf16.mxu0 0
    %87 = vmatpush2.bf16.msra.mxu0 0
    %88 = vmatprep.subr.bf16.mxu0 0
    %89 = vmatpush2.bf16.msra.mxu0 0
    %90 = vmatprep.subr.bf16.mxu0 0
    %91 = vmatpush2.bf16.msra.mxu0 0
    %92 = vmatprep.subr.bf16.mxu0 0
    %93 = vmatpush2.bf16.msra.mxu0 0
    %94 = vmatprep.subr.bf16.mxu0 0
    %95 = vmatpush2.bf16.msra.mxu0 0
    %96 = vmatprep.subr.bf16.mxu0 0
    %97 = vmatpush2.bf16.msra.mxu0 0
    %98 = vmatprep.subr.bf16.mxu0 0
    %99 = vmatpush2.bf16.msra.mxu0 0
    %100 = vmatprep.subr.bf16.mxu0 0
    %101 = vmatpush2.bf16.msra.mxu0 0
    %102 = vmatprep.mubr.bf16.mxu0 0
    %103 = vmatmul.mubr.bf16.gmra.mxu0 %v68
    %v104 = vpop.f32.mrf.mxu0
    %v105 = vadd.f32 %v52, %v104
    %v106 = vpop.f32.mrf.mxu0
    %v107 = vpop.f32.mrf.mxu0
    %v108 = vpop.f32.mrf.mxu0
    %109 = vdwg.mxu0
    %v110 = vpack.c.bf16 %v105, %v105
    %111 = vst [vmem:[#allocation7] sm:$0xf] %v110
    // Predicated region
    $region22: #{tpu_custom_call.1} parent=1 // pred_check
      _
    $region23: #{tpu_custom_call.1} parent=1 // pred_check_branch
      %113 = sbr.rel (0) target = $region25
    $region24: #{tpu_custom_call.1} parent=1 // pred_region
      %s115 = ssub.s32 64, 64
      %116 = vsyncadd [#allocation4], %s115
      %s118 = sshll.u32 [#allocation7], 4
      %s119 = int_to_ptr.vmem [resolvable:$true] %s118
      %121 = dma.vmem_to_hbm [thread:$0]  %s119, 64, %s3, [#allocation4]
    $region25: #{tpu_custom_call.1} parent=1 // pred_fallthru
      _
    // Predicated region
    $region26: #{tpu_custom_call.1} parent=1 // pred_check
      _
    $region27: #{tpu_custom_call.1} parent=1 // pred_check_branch
      %123 = sbr.rel (0) target = $region29
    $region28: #{tpu_custom_call.1} parent=1 // pred_region
      %124 = dma.done [#allocation4], 64
    $region29: #{tpu_custom_call.1} parent=1 // pred_fallthru
      _
    %125 = vsyncpa [#allocation3], 1
    %126 = vsyncpa [#allocation6], 1
    %127 = vsyncpa [#allocation4], 1

</llo_original>
